<compile_context>
chip_gen: v7x
topology: tpu7x:2x2x1
jax: 0.10.0
libtpu: 0.0.40
codegen_flags: <defaults>
</compile_context>

<pallas_src>
import functools
import math

import jax
import jax.numpy as jnp
from jax import lax
from jax.experimental import pallas as pl
from jax.experimental.pallas import tpu as pltpu

_BN_EPS = 1e-5
_VMEM_LIMIT = 32 * 1024 * 1024  # comfortably inside every generation's VMEM budget


# ----------------------------------------------------------------------------
# Kernels: fused (1x1-conv-as-matmul) + folded-BN bias + activation (+ residual)
# ----------------------------------------------------------------------------
def _conv1x1_bn_kernel(x_ref, w_ref, b_ref, o_ref, *, relu):
    # x_ref: (1, K, TN)   w_ref: (Cout, K)   b_ref: (Cout, 1)   o_ref: (1, Cout, TN)
    y = jnp.dot(w_ref[...], x_ref[0], preferred_element_type=jnp.float32)
    y = y + b_ref[...]
    if relu:
        y = jnp.maximum(y, 0.0)
    o_ref[0] = y.astype(o_ref.dtype)


def _conv1x1_bn_res_relu_kernel(x_ref, res_ref, w_ref, b_ref, o_ref):
    # Fused conv3 + BN3 + residual add + final ReLU; output is channels-first (lane-dense).
    y = jnp.dot(w_ref[...], x_ref[0], preferred_element_type=jnp.float32)
    y = y + b_ref[...] + res_ref[0].astype(jnp.float32)
    o_ref[0] = jnp.maximum(y, 0.0).astype(o_ref.dtype)


# ----------------------------------------------------------------------------
# Launchers
# ----------------------------------------------------------------------------
def _compiler_params():
    return pltpu.CompilerParams(
        dimension_semantics=("parallel", "parallel"),
        vmem_limit_bytes=_VMEM_LIMIT)


def _launch_conv1x1(x_cn, w, b, *, relu, out_dtype, tn):
    # x_cn: (B, K, N)  w: (Cout, K)  b: (Cout, 1) f32
    B, K, N = x_cn.shape
    cout = w.shape[0]
    kern = functools.partial(_conv1x1_bn_kernel, relu=relu)
    return pl.pallas_call(
        kern,
        out_shape=jax.ShapeDtypeStruct((B, cout, N), out_dtype),
        grid=(B, N // tn),
        in_specs=[
            pl.BlockSpec((1, K, tn), lambda b_, n_: (b_, 0, n_)),
            pl.BlockSpec((cout, K), lambda b_, n_: (0, 0)),   # weights stay resident
            pl.BlockSpec((cout, 1), lambda b_, n_: (0, 0)),
        ],
        out_specs=pl.BlockSpec((1, cout, tn), lambda b_, n_: (b_, 0, n_)),
        compiler_params=_compiler_params(),
    )(x_cn, w, b)


def _launch_conv1x1_res(x_cn, res_cn, w, b, *, out_dtype, tn):
    B, K, N = x_cn.shape
    cout = w.shape[0]
    return pl.pallas_call(
        _conv1x1_bn_res_relu_kernel,
        out_shape=jax.ShapeDtypeStruct((B, cout, N), out_dtype),
        grid=(B, N // tn),
        in_specs=[
            pl.BlockSpec((1, K, tn), lambda b_, n_: (b_, 0, n_)),
            pl.BlockSpec((1, cout, tn), lambda b_, n_: (b_, 0, n_)),
            pl.BlockSpec((cout, K), lambda b_, n_: (0, 0)),
            pl.BlockSpec((cout, 1), lambda b_, n_: (0, 0)),
        ],
        out_specs=pl.BlockSpec((1, cout, tn), lambda b_, n_: (b_, 0, n_)),
        compiler_params=_compiler_params(),
    )(x_cn, res_cn, w, b)


# ----------------------------------------------------------------------------
# Wrapper: full Bottleneck forward
# ----------------------------------------------------------------------------
def _fold_bn(w, bn):
    # eval-mode BatchNorm folded into a bias-free conv:
    #   BN(conv(x)) = conv_{w*s}(x) + (beta - mean*s),  s = gamma * rsqrt(var + eps)
    s = bn["gamma"] * lax.rsqrt(bn["var"] + _BN_EPS)
    wf = w * s.reshape((-1,) + (1,) * (w.ndim - 1))
    bf = bn["beta"] - bn["mean"] * s
    return wf, bf.reshape(-1, 1).astype(jnp.float32)


def _pick_tile_n(n, cap=512):
    if n <= cap:
        return n
    t = (cap // 128) * 128
    while t >= 128:
        if n % t == 0:
            return t
        t -= 128
    return n


def bottleneck_forward(x, params, *, stride=1, groups=1, dilation=1,
                       use_bf16_matmul=False, tile_n_cap=512):
    """Bottleneck.forward (eval-mode BatchNorm).  x: (B, Cin, H, W) float32 NCHW."""
    # TODO(synk): generic `downsample` modules, stride>1 and groups>1 are not translated;
    # the identity-residual configuration (downsample=None) is what is implemented.
    assert stride == 1 and groups == 1, "only stride=1, groups=1, downsample=None supported"
    B, cin, H, W = x.shape
    N = H * W
    width = params["conv2_w"].shape[0]
    cout = params["conv3_w"].shape[0]
    assert cin == cout, "downsample=None requires inplanes == planes * expansion"

    cdt = jnp.bfloat16 if use_bf16_matmul else jnp.float32   # MXU operand dtype
    tn = _pick_tile_n(N, tile_n_cap)

    # ---- fold BatchNorm running stats into the conv weights / biases ----
    w1, b1 = _fold_bn(params["conv1_w"].reshape(width, cin), params["bn1"])
    w2, b2 = _fold_bn(params["conv2_w"], params["bn2"])               # (width, width, 3, 3)
    w3, b3 = _fold_bn(params["conv3_w"].reshape(cout, width), params["bn3"])
    # flatten conv2 weights to (width, 9*width), matching the im2col channel order below
    w2 = jnp.transpose(w2, (0, 2, 3, 1)).reshape(width, 9 * width)

    x_cn = x.reshape(B, cin, N)                                       # free view, stays NCHW

    # ---- conv1 (1x1) + BN1 + ReLU ----
    y1 = _launch_conv1x1(x_cn.astype(cdt), w1.astype(cdt), b1,
                         relu=True, out_dtype=cdt, tn=tn)             # (B, width, N)

    # ---- im2col for the 3x3 conv (padding = dilation, stride = 1) ----
    # TODO(synk): the spatial-halo patch extraction stays in XLA; overlapping windows have
    # no clean static-BlockSpec Pallas equivalent with this tiling.
    d = dilation
    y1_img = y1.reshape(B, width, H, W)
    y1_pad = jnp.pad(y1_img, ((0, 0), (0, 0), (d, d), (d, d)))
    taps = [y1_pad[:, :, i * d:i * d + H, j * d:j * d + W]
            for i in range(3) for j in range(3)]
    patches = jnp.concatenate(taps, axis=1).reshape(B, 9 * width, N)  # (B, 9*width, N)

    # ---- conv2 (3x3 as matmul over patches) + BN2 + ReLU ----
    y2 = _launch_conv1x1(patches, w2.astype(cdt), b2,
                         relu=True, out_dtype=cdt, tn=tn)             # (B, width, N)

    # ---- conv3 (1x1) + BN3 + residual + ReLU, lane-dense channels-first output ----
    out = _launch_conv1x1_res(y2, x_cn.astype(jnp.float32), w3.astype(cdt), b3,
                              out_dtype=jnp.float32, tn=tn)           # (B, cout, N)

    return out.reshape(B, cout, H, W)   # already NCHW -> no output transpose


# ----------------------------------------------------------------------------
# Pure-XLA reference (independent check of fold / im2col / fusion correctness)
# ----------------------------------------------------------------------------
def _reference_forward(x, params, dilation=1):
    dn = ("NCHW", "OIHW", "NCHW")
    hp = lax.Precision.HIGHEST

    def bn(y, p):
        s = p["gamma"] / jnp.sqrt(p["var"] + _BN_EPS)
        return ((y - p["mean"][None, :, None, None]) * s[None, :, None, None]
                + p["beta"][None, :, None, None])

    y = lax.conv_general_dilated(x, params["conv1_w"], (1, 1), "VALID",
                                 dimension_numbers=dn, precision=hp)
    y = jax.nn.relu(bn(y, params["bn1"]))
    y = lax.conv_general_dilated(y, params["conv2_w"], (1, 1),
                                 [(dilation, dilation), (dilation, dilation)],
                                 rhs_dilation=(dilation, dilation),
                                 dimension_numbers=dn, precision=hp)
    y = jax.nn.relu(bn(y, params["bn2"]))
    y = lax.conv_general_dilated(y, params["conv3_w"], (1, 1), "VALID",
                                 dimension_numbers=dn, precision=hp)
    y = bn(y, params["bn3"])
    return jax.nn.relu(y + x)


# ----------------------------------------------------------------------------
# Deterministic parameter initialization (matches module __init__ shapes)
# ----------------------------------------------------------------------------
def init_params(key, inplanes, planes, base_width=64, groups=1):
    width = int(planes * (base_width / 64.0)) * groups
    cout = planes * 4                       # Bottleneck.expansion = 4
    ks = jax.random.split(key, 6)

    def conv_w(kk, co, ci, kh, kw):
        bound = 1.0 / math.sqrt(ci * kh * kw)   # PyTorch kaiming_uniform(a=sqrt(5)) bound
        return jax.random.uniform(kk, (co, ci, kh, kw), jnp.float32, -bound, bound)

    def bn_p(kk, c):                        # non-trivial running stats to exercise the fold
        kg, kb, km, kv = jax.random.split(kk, 4)
        return {"gamma": jax.random.uniform(kg, (c,), jnp.float32, 0.5, 1.5),
                "beta": 0.1 * jax.random.normal(kb, (c,), jnp.float32),
                "mean": 0.1 * jax.random.normal(km, (c,), jnp.float32),
                "var": jax.random.uniform(kv, (c,), jnp.float32, 0.5, 1.5)}

    return {
        "conv1_w": conv_w(ks[0], width, inplanes, 1, 1),
        "bn1": bn_p(ks[1], width),
        "conv2_w": conv_w(ks[2], width, width, 3, 3),
        "bn2": bn_p(ks[3], width),
        "conv3_w": conv_w(ks[4], cout, width, 1, 1),
        "bn3": bn_p(ks[5], cout),
    }


if __name__ == "__main__":
    B, inplanes, planes, H, W = 2, 16, 4, 16, 16      # width = 4, output channels = 16
    key = jax.random.PRNGKey(0)
    kx, kp = jax.random.split(key)
    x = jax.random.normal(kx, (B, inplanes, H, W), jnp.float32)
    params = init_params(kp, inplanes, planes)

    out = bottleneck_forward(x, params)
    out = jax.block_until_ready(out)
    assert out.shape == (B, planes * 4, H, W) and out.dtype == jnp.float32

    ref = _reference_forward(x, params)
    assert bool(jnp.allclose(out, ref, atol=5e-2, rtol=5e-2)), "mismatch vs XLA reference"
    print("KERNEL_OK")
</pallas_src>

<mosaic_0001>
module attributes {stable_mosaic.version = 11 : i64} {
  func.func @_conv1x1_bn_kernel(%arg0: i32, %arg1: i32, %arg2: memref<1x16x256xf32, #tpu.memory_space<vmem>>, %arg3: memref<4x16xf32, #tpu.memory_space<vmem>>, %arg4: memref<4x1xf32, #tpu.memory_space<vmem>>, %arg5: memref<1x4x256xf32, #tpu.memory_space<vmem>>) attributes {dimension_semantics = [#tpu.dimension_semantics<parallel>, #tpu.dimension_semantics<parallel>], iteration_bounds = array<i64: 2, 1>, scalar_prefetch = 0 : i64, scratch_operands = 0 : i64, tpu.core_type = #tpu.core_type<tc>, window_params = [{transform_indices = @transform_0, window_bounds = array<i64: 1, 16, 256>}, {pipeline_mode = #tpu.pipeline_mode<synchronous>, transform_indices = @transform_1, window_bounds = array<i64: 4, 16>}, {pipeline_mode = #tpu.pipeline_mode<synchronous>, transform_indices = @transform_2, window_bounds = array<i64: 4, 1>}, {transform_indices = @transform_3, window_bounds = array<i64: 1, 4, 256>}]} {
    %c0 = arith.constant 0 : index
    %c0_0 = arith.constant 0 : index
    %0 = vector.load %arg3[%c0, %c0_0] : memref<4x16xf32, #tpu.memory_space<vmem>>, vector<4x16xf32>
    %c0_1 = arith.constant 0 : index
    %c0_2 = arith.constant 0 : index
    %c0_3 = arith.constant 0 : index
    %1 = vector.load %arg2[%c0_1, %c0_2, %c0_3] : memref<1x16x256xf32, #tpu.memory_space<vmem>>, vector<1x16x256xf32>
    %2 = vector.shape_cast %1 : vector<1x16x256xf32> to vector<16x256xf32>
    %cst = arith.constant dense<0.000000e+00> : vector<4x256xf32>
    %3 = tpu.matmul %0, %2, %cst {dimension_numbers = #tpu.dot_dimension_numbers<[1], [0], [0], [1], [0, 0, 1, 1], [], []>} : vector<4x16xf32>, vector<16x256xf32>, vector<4x256xf32> -> vector<4x256xf32>
    %c0_4 = arith.constant 0 : index
    %c0_5 = arith.constant 0 : index
    %4 = vector.load %arg4[%c0_4, %c0_5] : memref<4x1xf32, #tpu.memory_space<vmem>>, vector<4x1xf32>
    %5 = vector.broadcast %4 : vector<4x1xf32> to vector<4x256xf32>
    %6 = arith.addf %3, %5 : vector<4x256xf32>
    %cst_6 = arith.constant 0.000000e+00 : f32
    %7 = vector.broadcast %cst_6 : f32 to vector<4x256xf32>
    %8 = arith.maximumf %6, %7 : vector<4x256xf32>
    %c0_7 = arith.constant 0 : index
    %c0_8 = arith.constant 0 : index
    %c0_9 = arith.constant 0 : index
    %9 = vector.load %arg5[%c0_7, %c0_8, %c0_9] : memref<1x4x256xf32, #tpu.memory_space<vmem>>, vector<1x4x256xf32>
    %10 = vector.shape_cast %9 : vector<1x4x256xf32> to vector<4x256xf32>
    %11 = vector.shape_cast %8 : vector<4x256xf32> to vector<1x4x256xf32>
    tpu.vector_store %arg5[%c0_7, %c0_8, %c0_9], %11 {strides = array<i32>} : memref<1x4x256xf32, #tpu.memory_space<vmem>>, vector<1x4x256xf32>,
    return
  }
  func.func @transform_0(%arg0: i32, %arg1: i32) -> (i32, i32, i32) {
    %c0_i32 = arith.constant 0 : i32
    %c0_i32_0 = arith.constant 0 : i32
    return %arg0, %c0_i32, %arg1 : i32, i32, i32
  }
  func.func @transform_1(%arg0: i32, %arg1: i32) -> (i32, i32) {
    %c0_i32 = arith.constant 0 : i32
    %c0_i32_0 = arith.constant 0 : i32
    %c0_i32_1 = arith.constant 0 : i32
    return %c0_i32, %c0_i32_0 : i32, i32
  }
  func.func @transform_2(%arg0: i32, %arg1: i32) -> (i32, i32) {
    %c0_i32 = arith.constant 0 : i32
    %c0_i32_0 = arith.constant 0 : i32
    %c0_i32_1 = arith.constant 0 : i32
    return %c0_i32, %c0_i32_0 : i32, i32
  }
  func.func @transform_3(%arg0: i32, %arg1: i32) -> (i32, i32, i32) {
    %c0_i32 = arith.constant 0 : i32
    %c0_i32_0 = arith.constant 0 : i32
    return %arg0, %c0_i32, %arg1 : i32, i32, i32
  }
}

</mosaic_0001>

<llo_original>
// kernel: tpu_custom_call.1
$region0: #{tpu_custom_call.1}
  #allocation0 [shape = 'u32[]', space=smem, size = 0x4, offset = 0x4, fixed_abs, tag = 'smem constant byte address 0x4 - core index']
  #allocation1 [shape = 'u32[144,128]{1,0:T(1,128)}', space=vmem, size = 0x12000, scoped, tag = 'internal scratch']
  %s0 = inlined_call_operand.hbm [shape: f32[2,16,256], index: 0, kind: input, shape index: {}]
  %s1 = inlined_call_operand.vmem [shape: f32[4,16], index: 1, kind: input, shape index: {}]
  %s2 = inlined_call_operand.vmem [shape: f32[4,1], index: 2, kind: input, shape index: {}]
  %s3 = inlined_call_operand.hbm [shape: f32[2,4,256], index: 3, kind: output, shape index: {}]
  %s4 = sld [smem:[#allocation0]]
  $region49: #{tpu_custom_call.1} parent=0
    _
  %s6 = ssub.s32 1, %s4
  %s7 = scalar_select 0, %s6, %s4
  $region1: #{tpu_custom_call.1} parent=0
    #allocation2 [shape = 'u8[32768]{0}', space=vmem, size = 0x8000, scoped, tag = 'input window, operand 0']
    #allocation3 [shape = 's32[2]{0}', space=sflag, size = 0x8, scoped, tag = 'scoped memory for tpu_custom_call.1']
    #allocation4 [shape = 's32[2]{0}', space=sflag, size = 0x8, scoped, tag = 'scoped memory for tpu_custom_call.1']
    #allocation5 [shape = 'u8[8192]{0}', space=vmem, size = 0x2000, scoped, tag = 'output window, operand 0']
    %8 = vsyncpa [#allocation3], 0
    %s9 = scalar_lea.sflag [#allocation3], 1
    %10 = vsyncpa %s9, 0
    %11 = vsyncpa [#allocation4], 0
    %s12 = scalar_lea.sflag [#allocation4], 1
    %13 = vsyncpa %s12, 0
    loop: start=0, step=1, limit=4
    $region2: #{tpu_custom_call.1} parent=1 // loop_pre_header
      _
    $region3: #{tpu_custom_call.1} parent=1 // loop_header
      %s15 = sphi 0, %s19
      %p16 = scmp.ge.s32.totalorder %s15, 4
      %s22 = sphi 0, %s34
      %s23 = sphi 0, %s30
      %s24 = sphi 0, %s22
      %s25 = sphi 0, %s23
      %s26 = sphi 0, %s24
      %s27 = sphi 0, %s25
      %s39 = sphi 0, %s41
      %s42 = sphi 0, %s39
      %s43 = sphi 0, %s42
      %s59 = sphi 0, %s43
      %s63 = sphi 0, %s63
      %s65 = sphi 0, %s63
      %s66 = sphi 0, %s65
      %s80 = sphi 0, %s66
      %s84 = sphi 0, %s84
      %s86 = sphi 0, %s84
      %s87 = sphi 0, %s86
      %s101 = sphi 0, %s87
      %s109 = sphi 0, %s111
      %s112 = sphi 0, %s109
      %s113 = sphi 0, %s112
      %s129 = sphi 0, %s113
    $region4: #{tpu_custom_call.1} parent=1 // loop_header_branch
      %18 = sbr.rel (%p16) target = $region8
    $region5: #{tpu_custom_call.1} parent=1 // loop_body
      %s20 = ssub.s32 %s15, 1
      %s21 = ssub.s32 %s15, 2
      %s28 = sadd.s32 1, %s23
      %p29 = scmp.ge.s32.totalorder %s28, 1
      %s30 = scalar_select %p29, 0, %s28
      %s31 = sadd.s32 1, %s22
      %s32 = scalar_select %p29, %s31, %s22
      %p33 = scmp.ge.s32.totalorder %s32, 2
      %s34 = scalar_select %p33, 0, %s32
      %s35 = ssub.s32 %s22, %s34
      %s36 = ssub.s32 %s23, %s30
      %s37 = sor.u32 %s35, %s36
      %p38 = scmp.eq.s32.totalorder %s37, 0
      %s40 = sadd.s32 %s39, 1
      %s41 = scalar_select %p38, %s39, %s40
      %p44 = pneg %p38
      %p45 = scmp.eq.s32.totalorder %s15, 1
      %p46 = por %p44, %p45
      %p47 = scmp.ne.s32.totalorder %s39, %s42
      %p48 = scmp.eq.s32.totalorder %s15, 0
      %p49 = por %p47, %p48
      %p50 = scmp.ne.s32.totalorder %s39, %s42
      %p51 = scmp.eq.s32.totalorder %s20, 1
      %p52 = por %p50, %p51
      %p53 = scmp.ne.s32.totalorder %s42, %s43
      %p54 = scmp.eq.s32.totalorder %s20, 0
      %p55 = por %p53, %p54
      %p56 = scmp.ne.s32.totalorder %s42, %s43
      %p57 = scmp.eq.s32.totalorder %s21, 1
      %p58 = por %p56, %p57
      %p60 = scmp.ne.s32.totalorder %s43, %s59
      %p61 = scmp.eq.s32.totalorder %s21, 0
      %p62 = por %p60, %p61
      %s64 = sadd.s32 %s63, 1
      %p67 = scmp.eq.s32.totalorder %s15, 1
      %p68 = scmp.ne.s32.totalorder %s63, %s65
      %p69 = scmp.eq.s32.totalorder %s15, 0
      %p70 = por %p68, %p69
      %p71 = scmp.ne.s32.totalorder %s63, %s65
      %p72 = scmp.eq.s32.totalorder %s20, 1
      %p73 = por %p71, %p72
      %p74 = scmp.ne.s32.totalorder %s65, %s66
      %p75 = scmp.eq.s32.totalorder %s20, 0
      %p76 = por %p74, %p75
      %p77 = scmp.ne.s32.totalorder %s65, %s66
      %p78 = scmp.eq.s32.totalorder %s21, 1
      %p79 = por %p77, %p78
      %p81 = scmp.ne.s32.totalorder %s66, %s80
      %p82 = scmp.eq.s32.totalorder %s21, 0
      %p83 = por %p81, %p82
      %s85 = sadd.s32 %s84, 1
      %p88 = scmp.eq.s32.totalorder %s15, 1
      %p89 = scmp.ne.s32.totalorder %s84, %s86
      %p90 = scmp.eq.s32.totalorder %s15, 0
      %p91 = por %p89, %p90
      %p92 = scmp.ne.s32.totalorder %s84, %s86
      %p93 = scmp.eq.s32.totalorder %s20, 1
      %p94 = por %p92, %p93
      %p95 = scmp.ne.s32.totalorder %s86, %s87
      %p96 = scmp.eq.s32.totalorder %s20, 0
      %p97 = por %p95, %p96
      %p98 = scmp.ne.s32.totalorder %s86, %s87
      %p99 = scmp.eq.s32.totalorder %s21, 1
      %p100 = por %p98, %p99
      %p102 = scmp.ne.s32.totalorder %s87, %s101
      %p103 = scmp.eq.s32.totalorder %s21, 0
      %p104 = por %p102, %p103
      %s105 = ssub.s32 %s22, %s34
      %s106 = ssub.s32 %s23, %s30
      %s107 = sor.u32 %s105, %s106
      %p108 = scmp.eq.s32.totalorder %s107, 0
      %s110 = sadd.s32 %s109, 1
      %s111 = scalar_select %p108, %s109, %s110
      %p114 = pneg %p108
      %p115 = scmp.eq.s32.totalorder %s15, 1
      %p116 = por %p114, %p115
      %p117 = scmp.ne.s32.totalorder %s109, %s112
      %p118 = scmp.eq.s32.totalorder %s15, 0
      %p119 = por %p117, %p118
      %p120 = scmp.ne.s32.totalorder %s109, %s112
      %p121 = scmp.eq.s32.totalorder %s20, 1
      %p122 = por %p120, %p121
      %p123 = scmp.ne.s32.totalorder %s112, %s113
      %p124 = scmp.eq.s32.totalorder %s20, 0
      %p125 = por %p123, %p124
      %p126 = scmp.ne.s32.totalorder %s112, %s113
      %p127 = scmp.eq.s32.totalorder %s21, 1
      %p128 = por %p126, %p127
      %p130 = scmp.ne.s32.totalorder %s113, %s129
      %p131 = scmp.eq.s32.totalorder %s21, 0
      %p132 = por %p130, %p131
      %p133 = scmp.le.s32.totalorder 1, %s15
      %p134 = scmp.lt.s32.totalorder %s15, 3
      %p135 = pnand %p133, %p134
      %p136 = pneg %p135
      // Predicated region
      $region9: #{tpu_custom_call.1} parent=5 // pred_check
        _
      $region10: #{tpu_custom_call.1} parent=5 // pred_check_branch
        %138 = sbr.rel (%p135) target = $region12
      $region11: #{tpu_custom_call.1} parent=5 // pred_region
        %s139 = ssub.s32 %s15, 1
        // Predicated region
        $region13: #{tpu_custom_call.1} parent=11 // pred_check
          %p140 = pneg %p76
        $region14: #{tpu_custom_call.1} parent=11 // pred_check_branch
          %142 = sbr.rel (%p140) target = $region16
        $region15: #{tpu_custom_call.1} parent=11 // pred_region
          _
        $region16: #{tpu_custom_call.1} parent=11 // pred_fallthru
          _
        // Predicated region
        $region17: #{tpu_custom_call.1} parent=11 // pred_check
          %p143 = pneg %p97
        $region18: #{tpu_custom_call.1} parent=11 // pred_check_branch
          %145 = sbr.rel (%p143) target = $region20
        $region19: #{tpu_custom_call.1} parent=11 // pred_region
          _
        $region20: #{tpu_custom_call.1} parent=11 // pred_fallthru
          _
      $region12: #{tpu_custom_call.1} parent=5 // pred_fallthru
        _
      %p146 = scmp.lt.s32.totalorder %s15, 2
      // Predicated region
      $region21: #{tpu_custom_call.1} parent=5 // pred_check
        %p147 = pneg %p146
      $region22: #{tpu_custom_call.1} parent=5 // pred_check_branch
        %149 = sbr.rel (%p147) target = $region24
      $region23: #{tpu_custom_call.1} parent=5 // pred_region
        // Predicated region
        $region25: #{tpu_custom_call.1} parent=23 // pred_check
          %p150 = pneg %p49
        $region26: #{tpu_custom_call.1} parent=23 // pred_check_branch
          %152 = sbr.rel (%p150) target = $region28
        $region27: #{tpu_custom_call.1} parent=23 // pred_region
          %s153 = sand.u32 %s39, 1
          %s154 = scalar_lea.sflag [#allocation3], %s153
          %s155 = sand.u32 %s39, 1
          %s156 = smul.addr %s155, 32
          %s157 = scalar_lea.vmem [#allocation2], %s156
          %s158 = smul.u32 2, %s23
          %s160 = ssub.s32 512, 512
          %161 = vsyncadd %s154, %s160
          %s162 = smul.addr %s22, 4
          %s163 = sadd.s32 %s158, %s162
          %s164 = smul.addr %s163, 128
          %s165 = scalar_lea.hbm %s0, %s164
          %s166 = sshll.u32 %s157, 4
          %s167 = int_to_ptr.vmem [resolvable:$true] %s166
          %172 = dma.hbm_to_vmem [thread:$0]  %s165, 512, %s167, %s154, 256, 256, 16
        $region28: #{tpu_custom_call.1} parent=23 // pred_fallthru
          _
      $region24: #{tpu_custom_call.1} parent=5 // pred_fallthru
        _
      %p173 = scmp.le.s32.totalorder 1, %s15
      %p174 = scmp.lt.s32.totalorder %s15, 3
      %p175 = pnand %p173, %p174
      %p176 = pneg %p175
      // Predicated region
      $region29: #{tpu_custom_call.1} parent=5 // pred_check
        _
      $region30: #{tpu_custom_call.1} parent=5 // pred_check_branch
        %178 = sbr.rel (%p175) target = $region32
      $region31: #{tpu_custom_call.1} parent=5 // pred_region
        %s179 = ssub.s32 %s15, 1
        %s180 = sand.u32 %s42, 1
        %s181 = scalar_lea.sflag [#allocation3], %s180
        %s182 = sand.u32 %s42, 1
        %s183 = smul.addr %s182, 32
        %s184 = scalar_lea.vmem [#allocation2], %s183
        // Predicated region
        $region33: #{tpu_custom_call.1} parent=31 // pred_check
          %p185 = pneg %p55
        $region34: #{tpu_custom_call.1} parent=31 // pred_check_branch
          %187 = sbr.rel (%p185) target = $region36
        $region35: #{tpu_custom_call.1} parent=31 // pred_region
          %188 = dma.done %s181, 512
        $region36: #{tpu_custom_call.1} parent=31 // pred_fallthru
          _
        %s189 = sand.u32 %s42, 1
        %s190 = scalar_lea.sflag [#allocation3], %s189
        %s191 = sand.u32 %s42, 1
        %s192 = smul.addr %s191, 32
        %s193 = scalar_lea.vmem [#allocation2], %s192
        %p194 = pneg %p55
        %p195 = pneg %p52
        %p196 = pneg %p76
        %p197 = pneg %p73
        %p198 = pneg %p97
        %p199 = pneg %p94
        %p200 = pneg %p125
        %p201 = pneg %p122
        %s202 = sand.u32 %s112, 1
        %s203 = scalar_lea.sflag [#allocation4], %s202
        %s204 = sand.u32 %s112, 1
        %s205 = smul.addr %s204, 8
        %s206 = scalar_lea.vmem [#allocation5], %s205
        %s207 = smul.u32 2, %s25
        %s208 = smul.u32 2, %s25
        %v209 = vld [vmem:[%s1] sm:$0xf]
        %v210 = vld [vmem:[%s184] sm:$0xff]
        %v211 = vld [vmem:[%s184 + $0x8] sm:$0xff]
        %v212 = vld [vmem:[%s184 + $0x10] sm:$0xff]
        %v213 = vld [vmem:[%s184 + $0x18] sm:$0xff]
        %v214 = vld [vmem:[%s2] sm:$0xf]
        %216 = vset.pattern.permute.xlu0 0
        %217 = vperm.xlu0 %216, %v214
        %v218 = vpop.permute.xlu0 %217
        %vm220 = vcmask 130048
        %v222 = vsel %vm220, %v209, 0
        %224 = vmatprep.subr.mxu0 %v211
        %225 = vmatpush1.msra.mxu0 %v210
        %226 = vmatprep.subr.mxu0 %v213
        %227 = vmatpush1.msra.mxu0 %v212
        %228 = vmatprep.subr.mxu0 0.0
        %229 = vmatpush1.msra.mxu0 0.0
        %230 = vmatprep.subr.mxu0 0.0
        %231 = vmatpush1.msra.mxu0 0.0
        %232 = vmatprep.subr.mxu0 0.0
        %233 = vmatpush1.msra.mxu0 0.0
        %234 = vmatprep.subr.mxu0 0.0
        %235 = vmatpush1.msra.mxu0 0.0
        %236 = vmatprep.subr.mxu0 0.0
        %237 = vmatpush1.msra.mxu0 0.0
        %238 = vmatprep.subr.mxu0 0.0
        %239 = vmatpush1.msra.mxu0 0.0
        %240 = vmatprep.subr.mxu0 0.0
        %241 = vmatpush1.msra.mxu0 0.0
        %242 = vmatprep.subr.mxu0 0.0
        %243 = vmatpush1.msra.mxu0 0.0
        %244 = vmatprep.subr.mxu0 0.0
        %245 = vmatpush1.msra.mxu0 0.0
        %246 = vmatprep.subr.mxu0 0.0
        %247 = vmatpush1.msra.mxu0 0.0
        %248 = vmatprep.subr.mxu0 0.0
        %249 = vmatpush1.msra.mxu0 0.0
        %250 = vmatprep.subr.mxu0 0.0
        %251 = vmatpush1.msra.mxu0 0.0
        %252 = vmatprep.subr.mxu0 0.0
        %253 = vmatpush1.msra.mxu0 0.0
        %254 = vmatprep.subr.mxu0 0.0
        %255 = vmatpush1.msra.mxu0 0.0
        %256 = vmatprep.subr.mxu0 0.0
        %257 = vmatpush1.msra.mxu0 0.0
        %258 = vmatprep.subr.mxu0 0.0
        %259 = vmatpush1.msra.mxu0 0.0
        %260 = vmatprep.subr.mxu0 0.0
        %261 = vmatpush1.msra.mxu0 0.0
        %262 = vmatprep.subr.mxu0 0.0
        %263 = vmatpush1.msra.mxu0 0.0
        %264 = vmatprep.subr.mxu0 0.0
        %265 = vmatpush1.msra.mxu0 0.0
        %266 = vmatprep.subr.mxu0 0.0
        %267 = vmatpush1.msra.mxu0 0.0
        %268 = vmatprep.subr.mxu0 0.0
        %269 = vmatpush1.msra.mxu0 0.0
        %270 = vmatprep.subr.mxu0 0.0
        %271 = vmatpush1.msra.mxu0 0.0
        %272 = vmatprep.subr.mxu0 0.0
        %273 = vmatpush1.msra.mxu0 0.0
        %274 = vmatprep.subr.mxu0 0.0
        %275 = vmatpush1.msra.mxu0 0.0
        %276 = vmatprep.subr.mxu0 0.0
        %277 = vmatpush1.msra.mxu0 0.0
        %278 = vmatprep.subr.mxu0 0.0
        %279 = vmatpush1.msra.mxu0 0.0
        %280 = vmatprep.subr.mxu0 0.0
        %281 = vmatpush1.msra.mxu0 0.0
        %282 = vmatprep.subr.mxu0 0.0
        %283 = vmatpush1.msra.mxu0 0.0
        %284 = vmatprep.subr.mxu0 0.0
        %285 = vmatpush1.msra.mxu0 0.0
        %286 = vmatprep.subr.mxu0 0.0
        %287 = vmatpush1.msra.mxu0 0.0
        %288 = vmatprep.mubr.f32.mxu0 0.0
        %289 = vmatmul.mubr.f32.gmra.mrb[0].mxu0 %v222
        %v290 = vpop.f32.mrb[0].mxu0
        %v291 = vadd.f32 %v218, %v290
        %v292 = vpop.f32.mrb[0].mxu0
        %v293 = vadd.f32 %v218, %v292
        %294 = vdwg.mxu0
        %v295 = vmax.f32 %v291, 0.0
        %v296 = vmax.f32 %v293, 0.0
        %v299 = vcombine.low %v295, %v296
        %301 = vst [vmem:[%s206] sm:$0xff] %v299
        %s302 = sand.u32 %s112, 1
        %s303 = scalar_lea.sflag [#allocation4], %s302
        %s304 = sand.u32 %s112, 1
        %s305 = smul.addr %s304, 8
        %s306 = scalar_lea.vmem [#allocation5], %s305
        // Predicated region
        $region37: #{tpu_custom_call.1} parent=31 // pred_check
          %p307 = pneg %p122
        $region38: #{tpu_custom_call.1} parent=31 // pred_check_branch
          %309 = sbr.rel (%p307) target = $region40
        $region39: #{tpu_custom_call.1} parent=31 // pred_region
          %s310 = smul.u32 2, %s25
          %s312 = ssub.s32 128, 128
          %313 = vsyncadd %s303, %s312
          %s314 = smul.addr %s24, 2
          %s315 = sadd.s32 %s310, %s314
          %s316 = smul.addr %s315, 64
          %s317 = scalar_lea.hbm %s3, %s316
          %s319 = sshll.u32 %s306, 4
          %s320 = int_to_ptr.vmem [resolvable:$true] %s319
          %322 = dma.vmem_to_hbm [thread:$0]  %s320, 128, %s317, %s303
        $region40: #{tpu_custom_call.1} parent=31 // pred_fallthru
          _
      $region32: #{tpu_custom_call.1} parent=5 // pred_fallthru
        _
      %p323 = scmp.le.s32.totalorder 2, %s15
      // Predicated region
      $region41: #{tpu_custom_call.1} parent=5 // pred_check
        %p324 = pneg %p323
      $region42: #{tpu_custom_call.1} parent=5 // pred_check_branch
        %326 = sbr.rel (%p324) target = $region44
      $region43: #{tpu_custom_call.1} parent=5 // pred_region
        %s327 = ssub.s32 %s15, 2
        // Predicated region
        $region45: #{tpu_custom_call.1} parent=43 // pred_check
          %p328 = pneg %p128
        $region46: #{tpu_custom_call.1} parent=43 // pred_check_branch
          %330 = sbr.rel (%p328) target = $region48
        $region47: #{tpu_custom_call.1} parent=43 // pred_region
          %s331 = sand.u32 %s113, 1
          %s332 = scalar_lea.sflag [#allocation4], %s331
          %s333 = sand.u32 %s113, 1
          %s334 = smul.addr %s333, 8
          %s335 = scalar_lea.vmem [#allocation5], %s334
          %336 = dma.done %s332, 128
        $region48: #{tpu_custom_call.1} parent=43 // pred_fallthru
          _
      $region44: #{tpu_custom_call.1} parent=5 // pred_fallthru
        _
    $region6: #{tpu_custom_call.1} parent=1 // loop_footer
      %s19 = sadd.s32 1, %s15
    $region7: #{tpu_custom_call.1} parent=1 // loop_footer_branch
      %14 = sbr.rel target = $region3
    $region8: #{tpu_custom_call.1} parent=1 // loop_exit
      _
    %337 = vsyncpa [#allocation3], 1
    %s338 = scalar_lea.sflag [#allocation3], 1
    %339 = vsyncpa %s338, 1
    %340 = vsyncpa [#allocation4], 1
    %s341 = scalar_lea.sflag [#allocation4], 1
    %342 = vsyncpa %s341, 1

</llo_original>
